<compile_context>
chip_gen: v6e
topology: v6e:2x2x1
jax: 0.10.0
libtpu: 0.0.40
codegen_flags: <defaults>
</compile_context>

<pallas_src>
import functools

import jax
import jax.numpy as jnp
from jax import lax
from jax.experimental import pallas as pl
from jax.experimental.pallas import tpu as pltpu

LANES = 128          # lane width (last dim of a vreg tile)
SUBLANES = 8         # f32 sublane width
MAX_TILE = 1024      # max batch-tile rows (review: 512-1024 ~ 85% of roofline)
SMALL_BATCH_MAX = 256  # below this: single fused call (latency-dominated path)
VMEM_LIMIT = 32 * 1024 * 1024


def _round_up(x, m):
    return (x + m - 1) // m * m


def _slab_layout(state_size, param_dtype=jnp.float32):
    """Row offsets of each packed section inside the (rows, 128) param slab."""
    packing = max(1, 4 // jnp.dtype(param_dtype).itemsize)
    align = SUBLANES * packing            # 8 rows for f32, 16 for bf16
    sp = _round_up(max(state_size, 1), align)
    r_w1 = 0                              # (sp, 128)   fc1 weight (zero-padded)
    r_b1 = sp                             # 1 row       fc1 bias
    r_wh = _round_up(r_b1 + 1, align)     # (128, 128)  fused hidden [wv1 | wa1]
    r_bh = r_wh + LANES                   # 1 row       fused hidden bias
    r_wq = _round_up(r_bh + 1, align)     # (128, 128)  fused head (v+a | a)
    r_bq = r_wq + LANES                   # 1 row       fused head bias
    rows = _round_up(r_bq + 1, align)
    return dict(sp=sp, align=align, r_w1=r_w1, r_b1=r_b1, r_wh=r_wh,
                r_bh=r_bh, r_wq=r_wq, r_bq=r_bq, rows=rows)


def _forward_tile(state_tile, slab_ref, lay):
    """Fused 3-matmul forward for one batch tile.

    Returns (rows, 128) f32 `head` where col j (j < A) holds v + a_j and
    cols A..2A-1 hold a_j (per the packed head weights).
    """
    cdt = slab_ref.dtype                  # f32 or bf16 operands, f32 accum
    sp = lay["sp"]
    r_w1, r_b1 = lay["r_w1"], lay["r_b1"]
    r_wh, r_bh = lay["r_wh"], lay["r_bh"]
    r_wq, r_bq = lay["r_wq"], lay["r_bq"]

    x = jnp.dot(state_tile.astype(cdt), slab_ref[r_w1:r_w1 + sp, :],
                preferred_element_type=jnp.float32)
    x = jnp.maximum(x + slab_ref[r_b1:r_b1 + 1, :].astype(jnp.float32), 0.0)

    h = jnp.dot(x.astype(cdt), slab_ref[r_wh:r_wh + LANES, :],
                preferred_element_type=jnp.float32)
    h = jnp.maximum(h + slab_ref[r_bh:r_bh + 1, :].astype(jnp.float32), 0.0)

    head = jnp.dot(h.astype(cdt), slab_ref[r_wq:r_wq + LANES, :],
                   preferred_element_type=jnp.float32)
    return head + slab_ref[r_bq:r_bq + 1, :].astype(jnp.float32)


def _make_fused_kernel(lay, true_b, action_size):
    """Single-tile kernel: full forward + in-kernel advantage-mean subtraction."""
    A = action_size

    def kernel(state_ref, slab_ref, out_ref):
        head = _forward_tile(state_ref[...], slab_ref, lay)       # (rp, 128) f32
        row = lax.broadcasted_iota(jnp.int32, head.shape, 0)
        lane = lax.broadcasted_iota(jnp.int32, head.shape, 1)
        valid = (row < true_b) & (lane >= A) & (lane < 2 * A)     # true advantage entries
        adv = jnp.where(valid, head, 0.0)
        sum_a = jnp.sum(jnp.sum(adv, axis=1, keepdims=True), axis=0, keepdims=True)
        mean_a = sum_a * (1.0 / float(true_b * A))                # (1, 1)
        out_ref[...] = head - mean_a                              # cols <A are final q-values

    return kernel


def _make_tiled_kernel(lay, true_b, tile_rows, action_size):
    """Multi-tile kernel: forward + per-tile masked column sums (for the mean)."""

    def kernel(state_ref, slab_ref, out_ref, psum_ref):
        head = _forward_tile(state_ref[...], slab_ref, lay)       # (tb, 128) f32
        out_ref[...] = head
        # Masked per-tile column sums so the epilogue never re-reads `head`.
        row0 = pl.program_id(0) * tile_rows
        rows = row0 + lax.broadcasted_iota(jnp.int32, (tile_rows, LANES), 0)
        contrib = jnp.where(rows < true_b, head, 0.0)
        col_sum = jnp.sum(contrib, axis=0, keepdims=True)         # (1, 128)
        psum_ref[...] = jnp.broadcast_to(col_sum, (SUBLANES, LANES))

    return kernel


@functools.partial(jax.jit, static_argnames=("action_size",))
def qnetwork_forward(state, slab, *, action_size):
    """state: (B, state_size) float. slab: packed params from pack_params()."""
    B, S = state.shape
    A = action_size
    lay = _slab_layout(S, slab.dtype)
    sp = lay["sp"]
    state = state.astype(jnp.float32)

    if B <= SMALL_BATCH_MAX:
        # Latency path: one launch, epilogue fused in-kernel, only a slice left.
        rp = _round_up(B, SUBLANES)
        if rp != B or sp != S:                       # skip pad when already aligned
            state = jnp.pad(state, ((0, rp - B), (0, sp - S)))
        out = pl.pallas_call(
            _make_fused_kernel(lay, B, A),
            out_shape=jax.ShapeDtypeStruct((rp, LANES), jnp.float32),
            grid_spec=pltpu.PrefetchScalarGridSpec(
                num_scalar_prefetch=0,
                grid=(1,),
                in_specs=[
                    pl.BlockSpec((rp, sp), lambda i: (0, 0)),            # state
                    pl.BlockSpec((lay["rows"], LANES), lambda i: (0, 0)),  # slab
                ],
                out_specs=pl.BlockSpec((rp, LANES), lambda i: (0, 0)),
            ),
            compiler_params=pltpu.CompilerParams(
                dimension_semantics=("arbitrary",),
                vmem_limit_bytes=VMEM_LIMIT),
        )(state, slab)
        return out[:B, :A]

    # Throughput path: big tiles, >= 2 grid steps (feeds both v7x TensorCores).
    rows = _round_up(B, SUBLANES)
    tb = min(MAX_TILE, _round_up((rows + 1) // 2, SUBLANES))
    b_pad = _round_up(B, tb)
    n_tiles = b_pad // tb
    if b_pad != B or sp != S:                        # skip pad when already aligned
        state = jnp.pad(state, ((0, b_pad - B), (0, sp - S)))

    head, psums = pl.pallas_call(
        _make_tiled_kernel(lay, B, tb, A),
        out_shape=(
            jax.ShapeDtypeStruct((b_pad, LANES), jnp.float32),
            jax.ShapeDtypeStruct((n_tiles * SUBLANES, LANES), jnp.float32),
        ),
        grid_spec=pltpu.PrefetchScalarGridSpec(
            num_scalar_prefetch=0,
            grid=(n_tiles,),
            in_specs=[
                pl.BlockSpec((tb, sp), lambda i: (i, 0)),                # state tile
                pl.BlockSpec((lay["rows"], LANES), lambda i: (0, 0)),    # resident slab
            ],
            out_specs=[
                pl.BlockSpec((tb, LANES), lambda i: (i, 0)),             # head tile
                pl.BlockSpec((SUBLANES, LANES), lambda i: (i, 0)),       # per-tile sums
            ],
        ),
        compiler_params=pltpu.CompilerParams(
            dimension_semantics=("parallel",),       # shard batch tiles across TCs
            vmem_limit_bytes=VMEM_LIMIT),
    )(state, slab)

    # Tiny epilogue: mean from the per-tile sums (no re-read of `head` for it),
    # then one fused subtract+slice pass.
    mean_a = jnp.sum(psums[::SUBLANES, A:2 * A]) * (1.0 / float(B * A))
    return head[:B, :A] - mean_a


def pack_params(params, state_size, action_size, fc1_units=64,
                value_fc_units=32, advantage_fc_units=32, dtype=jnp.float32):
    """Pack all weights/biases into a single lane-dense (rows, 128) slab.

    Done once at init (off the hot path). Weights stored (in, out).
    `dtype=jnp.bfloat16` halves slab/state DMA bytes (f32 accumulation kept).
    """
    S, A = state_size, action_size
    F1, FV, FA = fc1_units, value_fc_units, advantage_fc_units
    assert F1 <= LANES and FV + FA <= LANES and 2 * A <= LANES

    lay = _slab_layout(S, dtype)
    slab = jnp.zeros((lay["rows"], LANES), jnp.float32)

    # fc1
    slab = slab.at[lay["r_w1"]:lay["r_w1"] + S, 0:F1].set(params["w1"])
    slab = slab.at[lay["r_b1"], 0:F1].set(params["b1"].reshape(F1))

    # fused hidden layer: [wv1 | wa1], [bv1 | ba1]
    slab = slab.at[lay["r_wh"]:lay["r_wh"] + F1, 0:FV].set(params["wv1"])
    slab = slab.at[lay["r_wh"]:lay["r_wh"] + F1, FV:FV + FA].set(params["wa1"])
    slab = slab.at[lay["r_bh"], 0:FV].set(params["bv1"].reshape(FV))
    slab = slab.at[lay["r_bh"], FV:FV + FA].set(params["ba1"].reshape(FA))

    # fused head: col j -> v + a_j ; col A+j -> a_j
    wv2 = params["wv2"]                    # (FV, 1)
    wa2 = params["wa2"]                    # (FA, A)
    bv2 = params["bv2"].reshape(())
    ba2 = params["ba2"].reshape(A)
    slab = slab.at[lay["r_wq"]:lay["r_wq"] + FV, 0:A].set(
        jnp.broadcast_to(wv2, (FV, A)))
    slab = slab.at[lay["r_wq"] + FV:lay["r_wq"] + FV + FA, 0:A].set(wa2)
    slab = slab.at[lay["r_wq"] + FV:lay["r_wq"] + FV + FA, A:2 * A].set(wa2)
    slab = slab.at[lay["r_bq"], 0:A].set(bv2 + ba2)
    slab = slab.at[lay["r_bq"], A:2 * A].set(ba2)
    return slab.astype(dtype)


def init_params(key, state_size, action_size,
                fc1_units=64, value_fc_units=32, advantage_fc_units=32):
    """PyTorch-Linear-style init U(-1/sqrt(in), 1/sqrt(in)); weights (in, out)."""
    def linear(key, fan_in, fan_out):
        kw, kb = jax.random.split(key)
        bound = 1.0 / jnp.sqrt(jnp.float32(fan_in))
        w = jax.random.uniform(kw, (fan_in, fan_out), jnp.float32, -bound, bound)
        b = jax.random.uniform(kb, (1, fan_out), jnp.float32, -bound, bound)
        return w, b

    keys = jax.random.split(key, 5)
    w1, b1 = linear(keys[0], state_size, fc1_units)
    wv1, bv1 = linear(keys[1], fc1_units, value_fc_units)
    wv2, bv2 = linear(keys[2], value_fc_units, 1)
    wa1, ba1 = linear(keys[3], fc1_units, advantage_fc_units)
    wa2, ba2 = linear(keys[4], advantage_fc_units, action_size)
    return {"w1": w1, "b1": b1, "wv1": wv1, "bv1": bv1, "wv2": wv2, "bv2": bv2,
            "wa1": wa1, "ba1": ba1, "wa2": wa2, "ba2": ba2}


def qnetwork_reference(state, p):
    """Pure-JAX reference of the PyTorch forward pass."""
    x = jax.nn.relu(state @ p["w1"] + p["b1"])
    v = jax.nn.relu(x @ p["wv1"] + p["bv1"])
    v = v @ p["wv2"] + p["bv2"]
    a = jax.nn.relu(x @ p["wa1"] + p["ba1"])
    a = a @ p["wa2"] + p["ba2"]
    return v + (a - jnp.mean(a))


if __name__ == "__main__":
    state_size = 8
    action_size = 4

    key = jax.random.PRNGKey(0)
    k_params, k_state, k_state_big = jax.random.split(key, 3)
    params = init_params(k_params, state_size, action_size)
    slab32 = pack_params(params, state_size, action_size)          # packed once

    # 1) Tiny action-selection batch -> fully fused single-call path.
    state = jax.random.normal(k_state, (2, state_size), jnp.float32)
    out = jax.block_until_ready(
        qnetwork_forward(state, slab32, action_size=action_size))
    ref = qnetwork_reference(state, params)
    assert out.shape == (2, action_size)
    assert jnp.allclose(out, ref, atol=1e-4, rtol=1e-4), (out, ref)

    # 2) Larger batch -> tiled multi-TensorCore path with in-kernel partial sums.
    state_big = jax.random.normal(k_state_big, (300, state_size), jnp.float32)
    out_big = jax.block_until_ready(
        qnetwork_forward(state_big, slab32, action_size=action_size))
    ref_big = qnetwork_reference(state_big, params)
    assert out_big.shape == (300, action_size)
    assert jnp.allclose(out_big, ref_big, atol=1e-3, rtol=1e-3)

    # 3) bf16 parameter slab (f32 accumulation) -> looser tolerance.
    slab16 = pack_params(params, state_size, action_size, dtype=jnp.bfloat16)
    out16 = jax.block_until_ready(
        qnetwork_forward(state, slab16, action_size=action_size))
    assert jnp.allclose(out16, ref, atol=8e-2, rtol=8e-2)

    print("KERNEL_OK")
</pallas_src>

<mosaic_0001>
module attributes {stable_mosaic.version = 11 : i64} {
  func.func @kernel(%arg0: i32, %arg1: memref<8x8xf32, #tpu.memory_space<vmem>>, %arg2: memref<288x128xf32, #tpu.memory_space<vmem>>, %arg3: memref<8x128xf32, #tpu.memory_space<vmem>>) attributes {dimension_semantics = [#tpu.dimension_semantics<arbitrary>], iteration_bounds = array<i64: 1>, scalar_prefetch = 0 : i64, scratch_operands = 0 : i64, tpu.core_type = #tpu.core_type<tc>, window_params = [{pipeline_mode = #tpu.pipeline_mode<synchronous>, transform_indices = @transform_0, window_bounds = array<i64: 8, 8>}, {pipeline_mode = #tpu.pipeline_mode<synchronous>, transform_indices = @transform_1, window_bounds = array<i64: 288, 128>}, {pipeline_mode = #tpu.pipeline_mode<synchronous>, transform_indices = @transform_2, window_bounds = array<i64: 8, 128>}]} {
    %c0 = arith.constant 0 : index
    %c0_0 = arith.constant 0 : index
    %0 = vector.load %arg1[%c0, %c0_0] : memref<8x8xf32, #tpu.memory_space<vmem>>, vector<8x8xf32>
    %c0_1 = arith.constant 0 : index
    %c0_2 = arith.constant 0 : index
    %1 = vector.load %arg2[%c0_1, %c0_2] : memref<288x128xf32, #tpu.memory_space<vmem>>, vector<8x128xf32>
    %cst = arith.constant dense<0.000000e+00> : vector<8x128xf32>
    %2 = tpu.matmul %0, %1, %cst {dimension_numbers = #tpu.dot_dimension_numbers<[1], [0], [0], [1], [0, 0, 1, 1], [], []>} : vector<8x8xf32>, vector<8x128xf32>, vector<8x128xf32> -> vector<8x128xf32>
    %c8 = arith.constant 8 : index
    %c0_3 = arith.constant 0 : index
    %3 = vector.load %arg2[%c8, %c0_3] : memref<288x128xf32, #tpu.memory_space<vmem>>, vector<1x128xf32>
    %4 = vector.broadcast %3 : vector<1x128xf32> to vector<8x128xf32>
    %5 = arith.addf %2, %4 : vector<8x128xf32>
    %cst_4 = arith.constant 0.000000e+00 : f32
    %6 = vector.broadcast %cst_4 : f32 to vector<8x128xf32>
    %7 = arith.maximumf %5, %6 : vector<8x128xf32>
    %c16 = arith.constant 16 : index
    %c0_5 = arith.constant 0 : index
    %8 = vector.load %arg2[%c16, %c0_5] : memref<288x128xf32, #tpu.memory_space<vmem>>, vector<128x128xf32>
    %cst_6 = arith.constant dense<0.000000e+00> : vector<8x128xf32>
    %9 = tpu.matmul %7, %8, %cst_6 {dimension_numbers = #tpu.dot_dimension_numbers<[1], [0], [0], [1], [0, 0, 1, 1], [], []>} : vector<8x128xf32>, vector<128x128xf32>, vector<8x128xf32> -> vector<8x128xf32>
    %c144 = arith.constant 144 : index
    %c0_7 = arith.constant 0 : index
    %10 = vector.load %arg2[%c144, %c0_7] : memref<288x128xf32, #tpu.memory_space<vmem>>, vector<1x128xf32>
    %11 = vector.broadcast %10 : vector<1x128xf32> to vector<8x128xf32>
    %12 = arith.addf %9, %11 : vector<8x128xf32>
    %cst_8 = arith.constant 0.000000e+00 : f32
    %13 = vector.broadcast %cst_8 : f32 to vector<8x128xf32>
    %14 = arith.maximumf %12, %13 : vector<8x128xf32>
    %c152 = arith.constant 152 : index
    %c0_9 = arith.constant 0 : index
    %15 = vector.load %arg2[%c152, %c0_9] : memref<288x128xf32, #tpu.memory_space<vmem>>, vector<128x128xf32>
    %cst_10 = arith.constant dense<0.000000e+00> : vector<8x128xf32>
    %16 = tpu.matmul %14, %15, %cst_10 {dimension_numbers = #tpu.dot_dimension_numbers<[1], [0], [0], [1], [0, 0, 1, 1], [], []>} : vector<8x128xf32>, vector<128x128xf32>, vector<8x128xf32> -> vector<8x128xf32>
    %c280 = arith.constant 280 : index
    %c0_11 = arith.constant 0 : index
    %17 = vector.load %arg2[%c280, %c0_11] : memref<288x128xf32, #tpu.memory_space<vmem>>, vector<1x128xf32>
    %18 = vector.broadcast %17 : vector<1x128xf32> to vector<8x128xf32>
    %19 = arith.addf %16, %18 : vector<8x128xf32>
    %20 = tpu.iota {dimensions = array<i32: 0>} : vector<8x128xi32>
    %21 = tpu.iota {dimensions = array<i32: 1>} : vector<8x128xi32>
    %c2_i32 = arith.constant 2 : i32
    %22 = vector.broadcast %c2_i32 : i32 to vector<8x128xi32>
    %23 = arith.cmpi slt, %20, %22 : vector<8x128xi32>
    %c4_i32 = arith.constant 4 : i32
    %24 = vector.broadcast %c4_i32 : i32 to vector<8x128xi32>
    %25 = arith.cmpi sge, %21, %24 : vector<8x128xi32>
    %26 = arith.andi %23, %25 : vector<8x128xi1>
    %c8_i32 = arith.constant 8 : i32
    %27 = vector.broadcast %c8_i32 : i32 to vector<8x128xi32>
    %28 = arith.cmpi slt, %21, %27 : vector<8x128xi32>
    %29 = arith.andi %26, %28 : vector<8x128xi1>
    %cst_12 = arith.constant 0.000000e+00 : f32
    %30 = vector.broadcast %cst_12 : f32 to vector<8x128xf32>
    %31 = arith.select %29, %19, %30 : vector<8x128xi1>, vector<8x128xf32>
    %cst_13 = arith.constant dense<0.000000e+00> : vector<8xf32>
    %32 = vector.multi_reduction <add>, %31, %cst_13 [1] : vector<8x128xf32> to vector<8xf32>
    %33 = vector.shape_cast %32 : vector<8xf32> to vector<8x1xf32>
    %cst_14 = arith.constant dense<0.000000e+00> : vector<1xf32>
    %34 = vector.multi_reduction <add>, %33, %cst_14 [0] : vector<8x1xf32> to vector<1xf32>
    %35 = vector.shape_cast %34 : vector<1xf32> to vector<1x1xf32>
    %cst_15 = arith.constant 1.250000e-01 : f32
    %36 = vector.broadcast %cst_15 : f32 to vector<1x1xf32>
    %37 = arith.mulf %35, %36 : vector<1x1xf32>
    %38 = vector.broadcast %37 : vector<1x1xf32> to vector<8x128xf32>
    %39 = arith.subf %19, %38 : vector<8x128xf32>
    %c0_16 = arith.constant 0 : index
    %c0_17 = arith.constant 0 : index
    %40 = vector.load %arg3[%c0_16, %c0_17] : memref<8x128xf32, #tpu.memory_space<vmem>>, vector<8x128xf32>
    tpu.vector_store %arg3[%c0_16, %c0_17], %39 {strides = array<i32>} : memref<8x128xf32, #tpu.memory_space<vmem>>, vector<8x128xf32>,
    return
  }
  func.func @transform_0(%arg0: i32) -> (i32, i32) {
    %c0_i32 = arith.constant 0 : i32
    %c0_i32_0 = arith.constant 0 : i32
    %c0_i32_1 = arith.constant 0 : i32
    return %c0_i32, %c0_i32_0 : i32, i32
  }
  func.func @transform_1(%arg0: i32) -> (i32, i32) {
    %c0_i32 = arith.constant 0 : i32
    %c0_i32_0 = arith.constant 0 : i32
    %c0_i32_1 = arith.constant 0 : i32
    return %c0_i32, %c0_i32_0 : i32, i32
  }
  func.func @transform_2(%arg0: i32) -> (i32, i32) {
    %c0_i32 = arith.constant 0 : i32
    %c0_i32_0 = arith.constant 0 : i32
    %c0_i32_1 = arith.constant 0 : i32
    return %c0_i32, %c0_i32_0 : i32, i32
  }
}

</mosaic_0001>

<llo_original>
// kernel: qnetwork_forward.1
$region0: #{qnetwork_forward.1}
  #allocation0 [shape = 'u32[]', space=smem, size = 0x4, offset = 0x4, fixed_abs, tag = 'smem constant byte address 0x4 - core index']
  #allocation1 [shape = 'u32[144,128]{1,0:T(1,128)}', space=vmem, size = 0x12000, scoped, tag = 'internal scratch']
  %s0 = inlined_call_operand.vmem [shape: f32[8,8], index: 0, kind: input, shape index: {}]
  %s1 = inlined_call_operand.hbm [shape: f32[288,128], index: 1, kind: input, shape index: {}]
  %s2 = inlined_call_operand.vmem [shape: f32[8,128], index: 2, kind: output, shape index: {}]
  %s3 = sld [smem:[#allocation0]]
  $region22: #{qnetwork_forward.1} parent=0
    _
  %s5 = ssub.s32 1, %s3
  %s6 = scalar_select 0, %s5, %s3
  $region1: #{qnetwork_forward.1} parent=0
    #allocation2 [shape = 'u8[147456]{0}', space=vmem, size = 0x24000, scoped, tag = 'input window, operand 1, single buffered']
    #allocation3 [shape = 's32[1]{0}', space=sflag, size = 0x4, scoped, tag = 'scoped memory for qnetwork_forward.1']
    %7 = vsyncpa [#allocation3], 0
    // Predicated region
    $region2: #{qnetwork_forward.1} parent=1 // pred_check
      _
    $region3: #{qnetwork_forward.1} parent=1 // pred_check_branch
      %9 = sbr.rel (0) target = $region5
    $region4: #{qnetwork_forward.1} parent=1 // pred_region
      _
    $region5: #{qnetwork_forward.1} parent=1 // pred_fallthru
      _
    // Predicated region
    $region6: #{qnetwork_forward.1} parent=1 // pred_check
      _
    $region7: #{qnetwork_forward.1} parent=1 // pred_check_branch
      %11 = sbr.rel (0) target = $region9
    $region8: #{qnetwork_forward.1} parent=1 // pred_region
      %s13 = ssub.s32 4608, 4608
      %14 = vsyncadd [#allocation3], %s13
      %s15 = sshll.u32 [#allocation2], 4
      %s16 = int_to_ptr.vmem [resolvable:$true] %s15
      %21 = dma.hbm_to_vmem [thread:$0]  %s1, 4608, %s16, [#allocation3], 128, 128, 8
    $region9: #{qnetwork_forward.1} parent=1 // pred_fallthru
      _
    // Predicated region
    $region10: #{qnetwork_forward.1} parent=1 // pred_check
      _
    $region11: #{qnetwork_forward.1} parent=1 // pred_check_branch
      %23 = sbr.rel (0) target = $region13
    $region12: #{qnetwork_forward.1} parent=1 // pred_region
      %24 = dma.done [#allocation3], 4608
    $region13: #{qnetwork_forward.1} parent=1 // pred_fallthru
      _
    %v25 = vld [vmem:[%s0] sm:$0xff]
    %v26 = vld [vmem:[#allocation2] sm:$0xff]
    %v27 = vld [vmem:[#allocation2 + $0x8] sm:$0x1]
    %v28 = vlaneseq
    %v29 = vshrl.u32 %v28, 7
    %v30 = vsub.s32 0, %v29
    %v31 = vrot.slane %v27, %v30
    %vm32 = vcmask 64512
    %v34 = vsel %vm32, %v25, 0
    %36 = vmatprep.subr.mxu0 0.0
    %37 = vmatpush1.msra.mxu0 0.0
    %38 = vmatprep.subr.mxu0 0.0
    %39 = vmatpush1.msra.mxu0 0.0
    %40 = vmatprep.subr.mxu0 0.0
    %41 = vmatpush1.msra.mxu0 0.0
    %42 = vmatprep.subr.mxu0 0.0
    %43 = vmatpush1.msra.mxu0 0.0
    %44 = vmatprep.subr.mxu0 0.0
    %45 = vmatpush1.msra.mxu0 0.0
    %46 = vmatprep.subr.mxu0 0.0
    %47 = vmatpush1.msra.mxu0 0.0
    %48 = vmatprep.subr.mxu0 0.0
    %49 = vmatpush1.msra.mxu0 0.0
    %50 = vmatprep.subr.mxu0 0.0
    %51 = vmatpush1.msra.mxu0 0.0
    %52 = vmatprep.subr.mxu0 0.0
    %53 = vmatpush1.msra.mxu0 0.0
    %54 = vmatprep.subr.mxu0 0.0
    %55 = vmatpush1.msra.mxu0 0.0
    %56 = vmatprep.subr.mxu0 0.0
    %57 = vmatpush1.msra.mxu0 0.0
    %58 = vmatprep.subr.mxu0 0.0
    %59 = vmatpush1.msra.mxu0 0.0
    %60 = vmatprep.subr.mxu0 0.0
    %61 = vmatpush1.msra.mxu0 0.0
    %62 = vmatprep.subr.mxu0 0.0
    %63 = vmatpush1.msra.mxu0 0.0
    %64 = vmatprep.subr.mxu0 0.0
    %65 = vmatpush1.msra.mxu0 0.0
    %66 = vmatprep.subr.mxu0 0.0
    %67 = vmatpush1.msra.mxu0 %v26
    %68 = vmatprep.subr.mxu0 0.0
    %69 = vmatpush2.msra.mxu0 0.0
    %70 = vmatprep.subr.mxu0 0.0
    %71 = vmatpush2.msra.mxu0 0.0
    %72 = vmatprep.subr.mxu0 0.0
    %73 = vmatpush2.msra.mxu0 0.0
    %74 = vmatprep.subr.mxu0 0.0
    %75 = vmatpush2.msra.mxu0 0.0
    %76 = vmatprep.subr.mxu0 0.0
    %77 = vmatpush2.msra.mxu0 0.0
    %78 = vmatprep.subr.mxu0 0.0
    %79 = vmatpush2.msra.mxu0 0.0
    %80 = vmatprep.subr.mxu0 0.0
    %81 = vmatpush2.msra.mxu0 0.0
    %82 = vmatprep.subr.mxu0 0.0
    %83 = vmatpush2.msra.mxu0 0.0
    %84 = vmatprep.subr.mxu0 0.0
    %85 = vmatpush2.msra.mxu0 0.0
    %86 = vmatprep.subr.mxu0 0.0
    %87 = vmatpush2.msra.mxu0 0.0
    %88 = vmatprep.subr.mxu0 0.0
    %89 = vmatpush2.msra.mxu0 0.0
    %90 = vmatprep.subr.mxu0 0.0
    %91 = vmatpush2.msra.mxu0 0.0
    %92 = vmatprep.subr.mxu0 0.0
    %93 = vmatpush2.msra.mxu0 0.0
    %94 = vmatprep.subr.mxu0 0.0
    %95 = vmatpush2.msra.mxu0 0.0
    %96 = vmatprep.subr.mxu0 0.0
    %97 = vmatpush2.msra.mxu0 0.0
    %98 = vmatprep.subr.mxu0 0.0
    %99 = vmatpush2.msra.mxu0 0.0
    %100 = vmatprep.mubr.f32.mxu0 0.0
    %101 = vmatmul.mubr.f32.gmra.mxu0 %v34
    %v102 = vpop.f32.mrf.mxu0
    %v103 = vadd.f32 %v31, %v102
    %v104 = vpop.f32.mrf.mxu0
    %105 = vdwg.mxu0
    %v106 = vmax.f32 %v103, 0.0
    %v107 = vld [vmem:[#allocation2 + $0x10] sm:$0xff]
    %v108 = vld [vmem:[#allocation2 + $0x18] sm:$0xff]
    %v109 = vld [vmem:[#allocation2 + $0x20] sm:$0xff]
    %v110 = vld [vmem:[#allocation2 + $0x28] sm:$0xff]
    %v111 = vld [vmem:[#allocation2 + $0x30] sm:$0xff]
    %v112 = vld [vmem:[#allocation2 + $0x38] sm:$0xff]
    %v113 = vld [vmem:[#allocation2 + $0x40] sm:$0xff]
    %v114 = vld [vmem:[#allocation2 + $0x48] sm:$0xff]
    %v115 = vld [vmem:[#allocation2 + $0x50] sm:$0xff]
    %v116 = vld [vmem:[#allocation2 + $0x58] sm:$0xff]
    %v117 = vld [vmem:[#allocation2 + $0x60] sm:$0xff]
    %v118 = vld [vmem:[#allocation2 + $0x68] sm:$0xff]
    %v119 = vld [vmem:[#allocation2 + $0x70] sm:$0xff]
    %v120 = vld [vmem:[#allocation2 + $0x78] sm:$0xff]
    %v121 = vld [vmem:[#allocation2 + $0x80] sm:$0xff]
    %v122 = vld [vmem:[#allocation2 + $0x88] sm:$0xff]
    %v123 = vld [vmem:[#allocation2 + $0x90] sm:$0x1]
    %v124 = vlaneseq
    %v125 = vshrl.u32 %v124, 7
    %v126 = vsub.s32 0, %v125
    %v127 = vrot.slane %v123, %v126
    %128 = vmatprep.subr.mxu0 0.0
    %129 = vmatpush1.msra.mxu0 %v122
    %130 = vmatprep.subr.mxu0 0.0
    %131 = vmatpush1.msra.mxu0 %v121
    %132 = vmatprep.subr.mxu0 0.0
    %133 = vmatpush1.msra.mxu0 %v120
    %134 = vmatprep.subr.mxu0 0.0
    %135 = vmatpush1.msra.mxu0 %v119
    %136 = vmatprep.subr.mxu0 0.0
    %137 = vmatpush1.msra.mxu0 %v118
    %138 = vmatprep.subr.mxu0 0.0
    %139 = vmatpush1.msra.mxu0 %v117
    %140 = vmatprep.subr.mxu0 0.0
    %141 = vmatpush1.msra.mxu0 %v116
    %142 = vmatprep.subr.mxu0 0.0
    %143 = vmatpush1.msra.mxu0 %v115
    %144 = vmatprep.subr.mxu0 0.0
    %145 = vmatpush1.msra.mxu0 %v114
    %146 = vmatprep.subr.mxu0 0.0
    %147 = vmatpush1.msra.mxu0 %v113
    %148 = vmatprep.subr.mxu0 0.0
    %149 = vmatpush1.msra.mxu0 %v112
    %150 = vmatprep.subr.mxu0 0.0
    %151 = vmatpush1.msra.mxu0 %v111
    %152 = vmatprep.subr.mxu0 0.0
    %153 = vmatpush1.msra.mxu0 %v110
    %154 = vmatprep.subr.mxu0 0.0
    %155 = vmatpush1.msra.mxu0 %v109
    %156 = vmatprep.subr.mxu0 0.0
    %157 = vmatpush1.msra.mxu0 %v108
    %158 = vmatprep.subr.mxu0 0.0
    %159 = vmatpush1.msra.mxu0 %v107
    %160 = vmatprep.subr.mxu0 0.0
    %161 = vmatpush2.msra.mxu0 0.0
    %162 = vmatprep.subr.mxu0 0.0
    %163 = vmatpush2.msra.mxu0 0.0
    %164 = vmatprep.subr.mxu0 0.0
    %165 = vmatpush2.msra.mxu0 0.0
    %166 = vmatprep.subr.mxu0 0.0
    %167 = vmatpush2.msra.mxu0 0.0
    %168 = vmatprep.subr.mxu0 0.0
    %169 = vmatpush2.msra.mxu0 0.0
    %170 = vmatprep.subr.mxu0 0.0
    %171 = vmatpush2.msra.mxu0 0.0
    %172 = vmatprep.subr.mxu0 0.0
    %173 = vmatpush2.msra.mxu0 0.0
    %174 = vmatprep.subr.mxu0 0.0
    %175 = vmatpush2.msra.mxu0 0.0
    %176 = vmatprep.subr.mxu0 0.0
    %177 = vmatpush2.msra.mxu0 0.0
    %178 = vmatprep.subr.mxu0 0.0
    %179 = vmatpush2.msra.mxu0 0.0
    %180 = vmatprep.subr.mxu0 0.0
    %181 = vmatpush2.msra.mxu0 0.0
    %182 = vmatprep.subr.mxu0 0.0
    %183 = vmatpush2.msra.mxu0 0.0
    %184 = vmatprep.subr.mxu0 0.0
    %185 = vmatpush2.msra.mxu0 0.0
    %186 = vmatprep.subr.mxu0 0.0
    %187 = vmatpush2.msra.mxu0 0.0
    %188 = vmatprep.subr.mxu0 0.0
    %189 = vmatpush2.msra.mxu0 0.0
    %190 = vmatprep.subr.mxu0 0.0
    %191 = vmatpush2.msra.mxu0 0.0
    %192 = vmatprep.mubr.f32.mxu0 0.0
    %193 = vmatmul.mubr.f32.gmra.mxu0 %v106
    %v194 = vpop.f32.mrf.mxu0
    %v195 = vadd.f32 %v127, %v194
    %v196 = vpop.f32.mrf.mxu0
    %197 = vdwg.mxu0
    %v198 = vmax.f32 %v195, 0.0
    %v199 = vld [vmem:[#allocation2 + $0x98] sm:$0xff]
    %v200 = vld [vmem:[#allocation2 + $0xa0] sm:$0xff]
    %v201 = vld [vmem:[#allocation2 + $0xa8] sm:$0xff]
    %v202 = vld [vmem:[#allocation2 + $0xb0] sm:$0xff]
    %v203 = vld [vmem:[#allocation2 + $0xb8] sm:$0xff]
    %v204 = vld [vmem:[#allocation2 + $0xc0] sm:$0xff]
    %v205 = vld [vmem:[#allocation2 + $0xc8] sm:$0xff]
    %v206 = vld [vmem:[#allocation2 + $0xd0] sm:$0xff]
    %v207 = vld [vmem:[#allocation2 + $0xd8] sm:$0xff]
    %v208 = vld [vmem:[#allocation2 + $0xe0] sm:$0xff]
    %v209 = vld [vmem:[#allocation2 + $0xe8] sm:$0xff]
    %v210 = vld [vmem:[#allocation2 + $0xf0] sm:$0xff]
    %v211 = vld [vmem:[#allocation2 + $0xf8] sm:$0xff]
    %v212 = vld [vmem:[#allocation2 + $0x100] sm:$0xff]
    %v213 = vld [vmem:[#allocation2 + $0x108] sm:$0xff]
    %v214 = vld [vmem:[#allocation2 + $0x110] sm:$0xff]
    %v215 = vld [vmem:[#allocation2 + $0x118] sm:$0x1]
    %v216 = vlaneseq
    %v217 = vshrl.u32 %v216, 7
    %v218 = vsub.s32 0, %v217
    %v219 = vrot.slane %v215, %v218
    %220 = vmatprep.subr.mxu0 0.0
    %221 = vmatpush1.msra.mxu0 %v214
    %222 = vmatprep.subr.mxu0 0.0
    %223 = vmatpush1.msra.mxu0 %v213
    %224 = vmatprep.subr.mxu0 0.0
    %225 = vmatpush1.msra.mxu0 %v212
    %226 = vmatprep.subr.mxu0 0.0
    %227 = vmatpush1.msra.mxu0 %v211
    %228 = vmatprep.subr.mxu0 0.0
    %229 = vmatpush1.msra.mxu0 %v210
    %230 = vmatprep.subr.mxu0 0.0
    %231 = vmatpush1.msra.mxu0 %v209
    %232 = vmatprep.subr.mxu0 0.0
    %233 = vmatpush1.msra.mxu0 %v208
    %234 = vmatprep.subr.mxu0 0.0
    %235 = vmatpush1.msra.mxu0 %v207
    %236 = vmatprep.subr.mxu0 0.0
    %237 = vmatpush1.msra.mxu0 %v206
    %238 = vmatprep.subr.mxu0 0.0
    %239 = vmatpush1.msra.mxu0 %v205
    %240 = vmatprep.subr.mxu0 0.0
    %241 = vmatpush1.msra.mxu0 %v204
    %242 = vmatprep.subr.mxu0 0.0
    %243 = vmatpush1.msra.mxu0 %v203
    %244 = vmatprep.subr.mxu0 0.0
    %245 = vmatpush1.msra.mxu0 %v202
    %246 = vmatprep.subr.mxu0 0.0
    %247 = vmatpush1.msra.mxu0 %v201
    %248 = vmatprep.subr.mxu0 0.0
    %249 = vmatpush1.msra.mxu0 %v200
    %250 = vmatprep.subr.mxu0 0.0
    %251 = vmatpush1.msra.mxu0 %v199
    %252 = vmatprep.subr.mxu0 0.0
    %253 = vmatpush2.msra.mxu0 0.0
    %254 = vmatprep.subr.mxu0 0.0
    %255 = vmatpush2.msra.mxu0 0.0
    %256 = vmatprep.subr.mxu0 0.0
    %257 = vmatpush2.msra.mxu0 0.0
    %258 = vmatprep.subr.mxu0 0.0
    %259 = vmatpush2.msra.mxu0 0.0
    %260 = vmatprep.subr.mxu0 0.0
    %261 = vmatpush2.msra.mxu0 0.0
    %262 = vmatprep.subr.mxu0 0.0
    %263 = vmatpush2.msra.mxu0 0.0
    %264 = vmatprep.subr.mxu0 0.0
    %265 = vmatpush2.msra.mxu0 0.0
    %266 = vmatprep.subr.mxu0 0.0
    %267 = vmatpush2.msra.mxu0 0.0
    %268 = vmatprep.subr.mxu0 0.0
    %269 = vmatpush2.msra.mxu0 0.0
    %270 = vmatprep.subr.mxu0 0.0
    %271 = vmatpush2.msra.mxu0 0.0
    %272 = vmatprep.subr.mxu0 0.0
    %273 = vmatpush2.msra.mxu0 0.0
    %274 = vmatprep.subr.mxu0 0.0
    %275 = vmatpush2.msra.mxu0 0.0
    %276 = vmatprep.subr.mxu0 0.0
    %277 = vmatpush2.msra.mxu0 0.0
    %278 = vmatprep.subr.mxu0 0.0
    %279 = vmatpush2.msra.mxu0 0.0
    %280 = vmatprep.subr.mxu0 0.0
    %281 = vmatpush2.msra.mxu0 0.0
    %282 = vmatprep.subr.mxu0 0.0
    %283 = vmatpush2.msra.mxu0 0.0
    %284 = vmatprep.mubr.f32.mxu0 0.0
    %285 = vmatmul.mubr.f32.gmra.mxu0 %v198
    %v286 = vpop.f32.mrf.mxu0
    %v287 = vadd.f32 %v219, %v286
    %v288 = vpop.f32.mrf.mxu0
    %289 = vdwg.mxu0
    %v290 = vlaneseq
    %v291 = vshrl.u32 %v290, 7
    %v292 = vlaneseq
    %v293 = vand.u32 %v292, 127
    %vm294 = vcmp.lt.s32.totalorder %v291, 2
    %vm295 = vcmp.ge.s32.totalorder %v293, 4
    %vm296 = vmand %vm294, %vm295
    %vm297 = vcmp.lt.s32.totalorder %v293, 8
    %vm298 = vmand %vm296, %vm297
    %v299 = vsel %vm298, %v287, 0.0
    %300 = vadd.xlane.f32.xlu0 %v299
    %v301 = vpop.xlane.xlu0 %300
    %v302 = vrot.slane %v301, 4
    %v303 = vadd.f32 %v301, %v302
    %v304 = vrot.slane %v303, 2
    %v305 = vadd.f32 %v303, %v304
    %v306 = vrot.slane %v305, 1
    %v307 = vadd.f32 %v305, %v306
    %v308 = vmul.f32 %v307, 0.125
    %v309 = vsub.f32 %v287, %v308
    %310 = vst [vmem:[%s2] sm:$0xff] %v309
    // Predicated region
    $region14: #{qnetwork_forward.1} parent=1 // pred_check
      _
    $region15: #{qnetwork_forward.1} parent=1 // pred_check_branch
      %312 = sbr.rel (0) target = $region17
    $region16: #{qnetwork_forward.1} parent=1 // pred_region
      _
    $region17: #{qnetwork_forward.1} parent=1 // pred_fallthru
      _
    // Predicated region
    $region18: #{qnetwork_forward.1} parent=1 // pred_check
      _
    $region19: #{qnetwork_forward.1} parent=1 // pred_check_branch
      %314 = sbr.rel (0) target = $region21
    $region20: #{qnetwork_forward.1} parent=1 // pred_region
      _
    $region21: #{qnetwork_forward.1} parent=1 // pred_fallthru
      _
    %315 = vsyncpa [#allocation3], 1

</llo_original>
